<compile_context>
chip_gen: v7x
topology: tpu7x:2x2x1
jax: 0.10.0
libtpu: 0.0.40
codegen_flags: <defaults>
</compile_context>

<pallas_src>
import functools

import jax
import jax.numpy as jnp
from jax.experimental import pallas as pl
from jax.experimental.pallas import tpu as pltpu

LANE = 128


def _round_up(x, m):
    return (x + m - 1) // m * m


# ---------------------------------------------------------------------------
# Pallas kernel: fused 3-layer MLP (the entire PoseEncoder.forward hot path)
# ---------------------------------------------------------------------------
def pose_encoder_kernel(x_ref, w1_ref, b1_ref, w2_ref, b2_ref, w3_ref, b3_ref,
                        o_ref, *, activation):
    if activation == "relu":
        act = lambda v: jnp.maximum(v, 0.0)
    elif activation == "softplus":
        act = jax.nn.softplus            # EUP exp/log path, f32
    else:
        raise ValueError("activation must be 'relu' or 'softplus'")

    x = x_ref[...]                       # (bm, P) in compute dtype (bf16/f32)

    # fc1 + activation: bf16 MXU matmul, f32 accumulate, f32 epilogue.
    h1 = jnp.dot(x, w1_ref[...], preferred_element_type=jnp.float32)
    h1 = act(h1 + b1_ref[...])

    # fc2 + activation
    h2 = jnp.dot(h1.astype(w2_ref.dtype), w2_ref[...],
                 preferred_element_type=jnp.float32)
    h2 = act(h2 + b2_ref[...])

    # fc3 (no activation)
    out = jnp.dot(h2.astype(w3_ref.dtype), w3_ref[...],
                  preferred_element_type=jnp.float32)
    out = out + b3_ref[...]

    o_ref[...] = out.astype(o_ref.dtype)


# ---------------------------------------------------------------------------
# Wrapper-side weight prep: zero-pad hidden dims to 128 lanes, cast to bf16.
# ---------------------------------------------------------------------------
def prepare_params(params, compute_dtype):
    w1, b1, w2, b2, w3, b3 = (params["w1"], params["b1"], params["w2"],
                              params["b2"], params["w3"], params["b3"])
    H1, H2 = w1.shape[1], w2.shape[1]
    H1p, H2p = _round_up(H1, LANE), _round_up(H2, LANE)

    w1 = jnp.pad(w1, ((0, 0), (0, H1p - H1)))
    b1 = jnp.pad(b1, ((0, 0), (0, H1p - H1)))
    w2 = jnp.pad(w2, ((0, H1p - H1), (0, H2p - H2)))
    b2 = jnp.pad(b2, ((0, 0), (0, H2p - H2)))
    w3 = jnp.pad(w3, ((0, H2p - H2), (0, 0)))

    # Weights feed the MXU in the (narrow) compute dtype; biases stay f32 for
    # the f32 epilogue.
    return (w1.astype(compute_dtype), b1.astype(jnp.float32),
            w2.astype(compute_dtype), b2.astype(jnp.float32),
            w3.astype(compute_dtype), b3.astype(jnp.float32))


# ---------------------------------------------------------------------------
# pallas_call wrapper
# ---------------------------------------------------------------------------
def pose_encoder_forward(x, params, *, bm=1024, use_bf16=True,
                         activation="relu"):
    """Run the fused PoseEncoder MLP via pallas_call.

    x: (B, pose_feat_dims) float32
    params: dict with w1 (P,H1), b1 (1,H1), w2 (H1,H2), b2 (1,H2),
            w3 (H2,E), b3 (1,E)
    bm: batch tile.  Default 1024 (multiple of 256 for v6e/v7x MXU rows and
        of 128 for v5e); clamped to the sublane-aligned batch for small B.
    activation: 'relu' (module default) or 'softplus'.
    """
    compute_dtype = jnp.bfloat16 if use_bf16 else jnp.float32
    w1, b1, w2, b2, w3, b3 = prepare_params(params, compute_dtype)

    B, P = x.shape
    H1p = w1.shape[1]
    H2p = w2.shape[1]
    E = w3.shape[1]

    # Batch-tile alignment: 16 rows for bf16 sublane packing, 8 for f32.
    align = 16 if compute_dtype == jnp.bfloat16 else 8
    bm = max(align, min(bm, _round_up(B, align)))
    bm = _round_up(bm, align)

    grid = (pl.cdiv(B, bm),)

    x_in = x.astype(compute_dtype)

    # Weights / biases are small and constant across grid steps: replicate
    # the full tensor to every step (index_map always (0, 0)); Pallas skips
    # re-fetching an unchanged block across consecutive iterations.
    full = lambda shape: pl.BlockSpec(shape, lambda i: (0, 0))

    kernel = functools.partial(pose_encoder_kernel, activation=activation)

    return pl.pallas_call(
        kernel,
        out_shape=jax.ShapeDtypeStruct((B, E), jnp.float32),
        grid_spec=pltpu.PrefetchScalarGridSpec(
            num_scalar_prefetch=0,
            grid=grid,
            in_specs=[
                pl.BlockSpec((bm, P), lambda i: (i, 0)),   # x tile
                full((P, H1p)),                            # w1 (padded)
                full((1, H1p)),                            # b1
                full((H1p, H2p)),                          # w2
                full((1, H2p)),                            # b2
                full((H2p, E)),                            # w3
                full((1, E)),                              # b3
            ],
            out_specs=pl.BlockSpec((bm, E), lambda i: (i, 0)),
        ),
        compiler_params=pltpu.CompilerParams(
            dimension_semantics=("parallel",)),
    )(x_in, w1, b1, w2, b2, w3, b3)


# ---------------------------------------------------------------------------
# Deterministic parameter init (synthetic; mirrors the module's shapes)
# ---------------------------------------------------------------------------
def init_params(key, enc_feat_dims, pose_feat_dims):
    HIDDEN_DIM_1_DIV = 8
    HIDDEN_DIM_2_DIV = 4
    h1 = enc_feat_dims // HIDDEN_DIM_1_DIV
    h2 = enc_feat_dims // HIDDEN_DIM_2_DIV

    ks = jax.random.split(key, 6)

    def lin(kw, kb, fan_in, fan_out):
        # Kaiming-uniform-ish bound like torch.nn.Linear default init
        bound = 1.0 / jnp.sqrt(fan_in)
        w = jax.random.uniform(kw, (fan_in, fan_out), jnp.float32, -bound, bound)
        b = jax.random.uniform(kb, (1, fan_out), jnp.float32, -bound, bound)
        return w, b

    w1, b1 = lin(ks[0], ks[1], pose_feat_dims, h1)
    w2, b2 = lin(ks[2], ks[3], h1, h2)
    w3, b3 = lin(ks[4], ks[5], h2, enc_feat_dims)
    return dict(w1=w1, b1=b1, w2=w2, b2=b2, w3=w3, b3=b3)


# Pure-f32 reference (matches the PyTorch module exactly).
def reference_forward_f32(x, p, activation="relu"):
    act = (lambda v: jnp.maximum(v, 0.0)) if activation == "relu" else jax.nn.softplus
    h1 = act(x @ p["w1"] + p["b1"])
    h2 = act(h1 @ p["w2"] + p["b2"])
    return h2 @ p["w3"] + p["b3"]


# Mixed-precision reference mirroring the kernel's bf16-matmul / f32-epilogue
# numerics (uses the same padded / cast params).
def reference_forward_mixed(x, prepped, activation="relu"):
    act = (lambda v: jnp.maximum(v, 0.0)) if activation == "relu" else jax.nn.softplus
    w1, b1, w2, b2, w3, b3 = prepped
    h1 = jnp.dot(x.astype(w1.dtype), w1, preferred_element_type=jnp.float32)
    h1 = act(h1 + b1)
    h2 = jnp.dot(h1.astype(w2.dtype), w2, preferred_element_type=jnp.float32)
    h2 = act(h2 + b2)
    out = jnp.dot(h2.astype(w3.dtype), w3, preferred_element_type=jnp.float32)
    return out + b3


if __name__ == "__main__":
    # Small shapes implied by the module: x is (batch, pose_feat_dims).
    enc_feat_dims = 256     # -> hidden_dim_1 = 32, hidden_dim_2 = 64
    pose_feat_dims = 32
    batch = 256             # small demo batch; bm=128 -> 2 parallel grid steps

    key = jax.random.PRNGKey(0)
    kx, kp = jax.random.split(key)
    x = jax.random.normal(kx, (batch, pose_feat_dims), jnp.float32)
    params = init_params(kp, enc_feat_dims, pose_feat_dims)

    # --- ReLU branch (module default) ---
    out = pose_encoder_forward(x, params, bm=128, use_bf16=True,
                               activation="relu")
    out = jax.block_until_ready(out)
    assert out.shape == (batch, enc_feat_dims)

    # Tight check against a reference with identical bf16-matmul numerics.
    ref_mixed = reference_forward_mixed(x, prepare_params(params, jnp.bfloat16))
    assert jnp.allclose(out, ref_mixed, atol=1e-3, rtol=1e-3), \
        "mismatch vs mixed-precision reference"

    # Looser sanity check against the pure-f32 PyTorch-equivalent math
    # (bf16 weight/activation rounding drift only).
    ref_f32 = reference_forward_f32(x, params)
    assert jnp.allclose(out, ref_f32, atol=5e-2, rtol=5e-2), \
        "mismatch vs f32 reference"

    # --- Softplus branch (module's alternate activation): smoke test ---
    out_sp = pose_encoder_forward(x, params, bm=128, use_bf16=True,
                                  activation="softplus")
    out_sp = jax.block_until_ready(out_sp)
    assert out_sp.shape == (batch, enc_feat_dims)
    assert bool(jnp.all(jnp.isfinite(out_sp))), "softplus output not finite"
    ref_sp = reference_forward_f32(x, params, activation="softplus")
    assert jnp.allclose(out_sp, ref_sp, atol=1e-1, rtol=1e-1), \
        "mismatch vs f32 softplus reference"

    print("KERNEL_OK")
</pallas_src>

<mosaic_0001>
module attributes {stable_mosaic.version = 11 : i64} {
  func.func @pose_encoder_kernel(%arg0: i32, %arg1: memref<128x32xbf16, #tpu.memory_space<vmem>>, %arg2: memref<32x128xbf16, #tpu.memory_space<vmem>>, %arg3: memref<1x128xf32, #tpu.memory_space<vmem>>, %arg4: memref<128x128xbf16, #tpu.memory_space<vmem>>, %arg5: memref<1x128xf32, #tpu.memory_space<vmem>>, %arg6: memref<128x256xbf16, #tpu.memory_space<vmem>>, %arg7: memref<1x256xf32, #tpu.memory_space<vmem>>, %arg8: memref<128x256xf32, #tpu.memory_space<vmem>>) attributes {dimension_semantics = [#tpu.dimension_semantics<parallel>], iteration_bounds = array<i64: 2>, scalar_prefetch = 0 : i64, scratch_operands = 0 : i64, tpu.core_type = #tpu.core_type<tc>, window_params = [{transform_indices = @transform_0, window_bounds = array<i64: 128, 32>}, {pipeline_mode = #tpu.pipeline_mode<synchronous>, transform_indices = @transform_1, window_bounds = array<i64: 32, 128>}, {pipeline_mode = #tpu.pipeline_mode<synchronous>, transform_indices = @transform_2, window_bounds = array<i64: 1, 128>}, {pipeline_mode = #tpu.pipeline_mode<synchronous>, transform_indices = @transform_3, window_bounds = array<i64: 128, 128>}, {pipeline_mode = #tpu.pipeline_mode<synchronous>, transform_indices = @transform_4, window_bounds = array<i64: 1, 128>}, {pipeline_mode = #tpu.pipeline_mode<synchronous>, transform_indices = @transform_5, window_bounds = array<i64: 128, 256>}, {pipeline_mode = #tpu.pipeline_mode<synchronous>, transform_indices = @transform_6, window_bounds = array<i64: 1, 256>}, {transform_indices = @transform_7, window_bounds = array<i64: 128, 256>}]} {
    %c0 = arith.constant 0 : index
    %c0_0 = arith.constant 0 : index
    %0 = vector.load %arg1[%c0, %c0_0] : memref<128x32xbf16, #tpu.memory_space<vmem>>, vector<128x32xbf16>
    %c0_1 = arith.constant 0 : index
    %c0_2 = arith.constant 0 : index
    %1 = vector.load %arg2[%c0_1, %c0_2] : memref<32x128xbf16, #tpu.memory_space<vmem>>, vector<32x128xbf16>
    %cst = arith.constant dense<0.000000e+00> : vector<128x128xf32>
    %2 = tpu.matmul %0, %1, %cst {dimension_numbers = #tpu.dot_dimension_numbers<[1], [0], [0], [1], [0, 0, 1, 1], [], []>} : vector<128x32xbf16>, vector<32x128xbf16>, vector<128x128xf32> -> vector<128x128xf32>
    %c0_3 = arith.constant 0 : index
    %c0_4 = arith.constant 0 : index
    %3 = vector.load %arg3[%c0_3, %c0_4] : memref<1x128xf32, #tpu.memory_space<vmem>>, vector<1x128xf32>
    %4 = vector.broadcast %3 : vector<1x128xf32> to vector<128x128xf32>
    %5 = arith.addf %2, %4 : vector<128x128xf32>
    %cst_5 = arith.constant 0.000000e+00 : f32
    %6 = vector.broadcast %cst_5 : f32 to vector<128x128xf32>
    %7 = arith.maximumf %5, %6 : vector<128x128xf32>
    %8 = arith.truncf %7 : vector<128x128xf32> to vector<128x128xbf16>
    %c0_6 = arith.constant 0 : index
    %c0_7 = arith.constant 0 : index
    %9 = vector.load %arg4[%c0_6, %c0_7] : memref<128x128xbf16, #tpu.memory_space<vmem>>, vector<128x128xbf16>
    %cst_8 = arith.constant dense<0.000000e+00> : vector<128x128xf32>
    %10 = tpu.matmul %8, %9, %cst_8 {dimension_numbers = #tpu.dot_dimension_numbers<[1], [0], [0], [1], [0, 0, 1, 1], [], []>} : vector<128x128xbf16>, vector<128x128xbf16>, vector<128x128xf32> -> vector<128x128xf32>
    %c0_9 = arith.constant 0 : index
    %c0_10 = arith.constant 0 : index
    %11 = vector.load %arg5[%c0_9, %c0_10] : memref<1x128xf32, #tpu.memory_space<vmem>>, vector<1x128xf32>
    %12 = vector.broadcast %11 : vector<1x128xf32> to vector<128x128xf32>
    %13 = arith.addf %10, %12 : vector<128x128xf32>
    %cst_11 = arith.constant 0.000000e+00 : f32
    %14 = vector.broadcast %cst_11 : f32 to vector<128x128xf32>
    %15 = arith.maximumf %13, %14 : vector<128x128xf32>
    %16 = arith.truncf %15 : vector<128x128xf32> to vector<128x128xbf16>
    %c0_12 = arith.constant 0 : index
    %c0_13 = arith.constant 0 : index
    %17 = vector.load %arg6[%c0_12, %c0_13] : memref<128x256xbf16, #tpu.memory_space<vmem>>, vector<128x256xbf16>
    %cst_14 = arith.constant dense<0.000000e+00> : vector<128x256xf32>
    %18 = tpu.matmul %16, %17, %cst_14 {dimension_numbers = #tpu.dot_dimension_numbers<[1], [0], [0], [1], [0, 0, 1, 1], [], []>} : vector<128x128xbf16>, vector<128x256xbf16>, vector<128x256xf32> -> vector<128x256xf32>
    %c0_15 = arith.constant 0 : index
    %c0_16 = arith.constant 0 : index
    %19 = vector.load %arg7[%c0_15, %c0_16] : memref<1x256xf32, #tpu.memory_space<vmem>>, vector<1x256xf32>
    %20 = vector.broadcast %19 : vector<1x256xf32> to vector<128x256xf32>
    %21 = arith.addf %18, %20 : vector<128x256xf32>
    %c0_17 = arith.constant 0 : index
    %c0_18 = arith.constant 0 : index
    %22 = vector.load %arg8[%c0_17, %c0_18] : memref<128x256xf32, #tpu.memory_space<vmem>>, vector<128x256xf32>
    tpu.vector_store %arg8[%c0_17, %c0_18], %21 {strides = array<i32>} : memref<128x256xf32, #tpu.memory_space<vmem>>, vector<128x256xf32>,
    return
  }
  func.func @transform_0(%arg0: i32) -> (i32, i32) {
    %c0_i32 = arith.constant 0 : i32
    %c0_i32_0 = arith.constant 0 : i32
    return %arg0, %c0_i32 : i32, i32
  }
  func.func @transform_1(%arg0: i32) -> (i32, i32) {
    %c0_i32 = arith.constant 0 : i32
    %c0_i32_0 = arith.constant 0 : i32
    %c0_i32_1 = arith.constant 0 : i32
    return %c0_i32, %c0_i32_0 : i32, i32
  }
  func.func @transform_2(%arg0: i32) -> (i32, i32) {
    %c0_i32 = arith.constant 0 : i32
    %c0_i32_0 = arith.constant 0 : i32
    %c0_i32_1 = arith.constant 0 : i32
    return %c0_i32, %c0_i32_0 : i32, i32
  }
  func.func @transform_3(%arg0: i32) -> (i32, i32) {
    %c0_i32 = arith.constant 0 : i32
    %c0_i32_0 = arith.constant 0 : i32
    %c0_i32_1 = arith.constant 0 : i32
    return %c0_i32, %c0_i32_0 : i32, i32
  }
  func.func @transform_4(%arg0: i32) -> (i32, i32) {
    %c0_i32 = arith.constant 0 : i32
    %c0_i32_0 = arith.constant 0 : i32
    %c0_i32_1 = arith.constant 0 : i32
    return %c0_i32, %c0_i32_0 : i32, i32
  }
  func.func @transform_5(%arg0: i32) -> (i32, i32) {
    %c0_i32 = arith.constant 0 : i32
    %c0_i32_0 = arith.constant 0 : i32
    %c0_i32_1 = arith.constant 0 : i32
    return %c0_i32, %c0_i32_0 : i32, i32
  }
  func.func @transform_6(%arg0: i32) -> (i32, i32) {
    %c0_i32 = arith.constant 0 : i32
    %c0_i32_0 = arith.constant 0 : i32
    %c0_i32_1 = arith.constant 0 : i32
    return %c0_i32, %c0_i32_0 : i32, i32
  }
  func.func @transform_7(%arg0: i32) -> (i32, i32) {
    %c0_i32 = arith.constant 0 : i32
    %c0_i32_0 = arith.constant 0 : i32
    return %arg0, %c0_i32 : i32, i32
  }
}

</mosaic_0001>

<llo_original>
// kernel: tpu_custom_call.1
$region0: #{tpu_custom_call.1}
  #allocation0 [shape = 'u32[]', space=smem, size = 0x4, offset = 0x4, fixed_abs, tag = 'smem constant byte address 0x4 - core index']
  #allocation1 [shape = 'u32[144,128]{1,0:T(1,128)}', space=vmem, size = 0x12000, scoped, tag = 'internal scratch']
  %s0 = inlined_call_operand.vmem [shape: bf16[256,32], index: 0, kind: input, shape index: {}]
  %s1 = inlined_call_operand.vmem [shape: bf16[32,128], index: 1, kind: input, shape index: {}]
  %s2 = inlined_call_operand.vmem [shape: f32[1,128], index: 2, kind: input, shape index: {}]
  %s3 = inlined_call_operand.hbm [shape: bf16[128,128], index: 3, kind: input, shape index: {}]
  %s4 = inlined_call_operand.vmem [shape: f32[1,128], index: 4, kind: input, shape index: {}]
  %s5 = inlined_call_operand.vmem [shape: bf16[128,256], index: 5, kind: input, shape index: {}]
  %s6 = inlined_call_operand.vmem [shape: f32[1,256], index: 6, kind: input, shape index: {}]
  %s7 = inlined_call_operand.hbm [shape: f32[256,256], index: 7, kind: output, shape index: {}]
  %s8 = sld [smem:[#allocation0]]
  $region65: #{tpu_custom_call.1} parent=0
    _
  %s10 = ssub.s32 1, %s8
  %s11 = scalar_select 0, %s10, %s8
  $region1: #{tpu_custom_call.1} parent=0
    #allocation2 [shape = 'u8[32768]{0}', space=vmem, size = 0x8000, scoped, tag = 'input window, operand 3, single buffered']
    #allocation3 [shape = 's32[2]{0}', space=sflag, size = 0x8, scoped, tag = 'scoped memory for tpu_custom_call.1']
    #allocation4 [shape = 's32[2]{0}', space=sflag, size = 0x8, scoped, tag = 'scoped memory for tpu_custom_call.1']
    #allocation5 [shape = 'u8[262144]{0}', space=vmem, size = 0x40000, scoped, tag = 'output window, operand 0']
    %12 = vsyncpa [#allocation3], 0
    %13 = vsyncpa [#allocation4], 0
    %s14 = scalar_lea.sflag [#allocation4], 1
    %15 = vsyncpa %s14, 0
    loop: start=0, step=1, limit=4
    $region2: #{tpu_custom_call.1} parent=1 // loop_pre_header
      _
    $region3: #{tpu_custom_call.1} parent=1 // loop_header
      %s17 = sphi 0, %s21
      %p18 = scmp.ge.s32.totalorder %s17, 4
      %s27 = sphi 0, %s29
      %s30 = sphi 0, %s27
      %s31 = sphi 0, %s30
      %s47 = sphi 0, %s31
      %s51 = sphi 0, %s51
      %s53 = sphi 0, %s51
      %s54 = sphi 0, %s53
      %s68 = sphi 0, %s54
      %s72 = sphi 0, %s72
      %s74 = sphi 0, %s72
      %s75 = sphi 0, %s74
      %s89 = sphi 0, %s75
      %s93 = sphi 0, %s93
      %s95 = sphi 0, %s93
      %s96 = sphi 0, %s95
      %s110 = sphi 0, %s96
      %s114 = sphi 0, %s114
      %s116 = sphi 0, %s114
      %s117 = sphi 0, %s116
      %s131 = sphi 0, %s117
      %s135 = sphi 0, %s135
      %s137 = sphi 0, %s135
      %s138 = sphi 0, %s137
      %s152 = sphi 0, %s138
      %s156 = sphi 0, %s156
      %s158 = sphi 0, %s156
      %s159 = sphi 0, %s158
      %s173 = sphi 0, %s159
      %s179 = sphi 0, %s181
      %s182 = sphi 0, %s179
      %s183 = sphi 0, %s182
      %s199 = sphi 0, %s183
    $region4: #{tpu_custom_call.1} parent=1 // loop_header_branch
      %20 = sbr.rel (%p18) target = $region8
    $region5: #{tpu_custom_call.1} parent=1 // loop_body
      %s22 = ssub.s32 %s17, 1
      %s23 = ssub.s32 %s17, 2
      %s24 = sadd.s32 %s17, 1
      %s25 = ssub.s32 %s17, %s24
      %p26 = scmp.eq.s32.totalorder %s25, 0
      %s28 = sadd.s32 %s27, 1
      %s29 = scalar_select %p26, %s27, %s28
      %p32 = pneg %p26
      %p33 = scmp.eq.s32.totalorder %s17, 1
      %p34 = por %p32, %p33
      %p35 = scmp.ne.s32.totalorder %s27, %s30
      %p36 = scmp.eq.s32.totalorder %s17, 0
      %p37 = por %p35, %p36
      %p38 = scmp.ne.s32.totalorder %s27, %s30
      %p39 = scmp.eq.s32.totalorder %s22, 1
      %p40 = por %p38, %p39
      %p41 = scmp.ne.s32.totalorder %s30, %s31
      %p42 = scmp.eq.s32.totalorder %s22, 0
      %p43 = por %p41, %p42
      %p44 = scmp.ne.s32.totalorder %s30, %s31
      %p45 = scmp.eq.s32.totalorder %s23, 1
      %p46 = por %p44, %p45
      %p48 = scmp.ne.s32.totalorder %s31, %s47
      %p49 = scmp.eq.s32.totalorder %s23, 0
      %p50 = por %p48, %p49
      %s52 = sadd.s32 %s51, 1
      %p55 = scmp.eq.s32.totalorder %s17, 1
      %p56 = scmp.ne.s32.totalorder %s51, %s53
      %p57 = scmp.eq.s32.totalorder %s17, 0
      %p58 = por %p56, %p57
      %p59 = scmp.ne.s32.totalorder %s51, %s53
      %p60 = scmp.eq.s32.totalorder %s22, 1
      %p61 = por %p59, %p60
      %p62 = scmp.ne.s32.totalorder %s53, %s54
      %p63 = scmp.eq.s32.totalorder %s22, 0
      %p64 = por %p62, %p63
      %p65 = scmp.ne.s32.totalorder %s53, %s54
      %p66 = scmp.eq.s32.totalorder %s23, 1
      %p67 = por %p65, %p66
      %p69 = scmp.ne.s32.totalorder %s54, %s68
      %p70 = scmp.eq.s32.totalorder %s23, 0
      %p71 = por %p69, %p70
      %s73 = sadd.s32 %s72, 1
      %p76 = scmp.eq.s32.totalorder %s17, 1
      %p77 = scmp.ne.s32.totalorder %s72, %s74
      %p78 = scmp.eq.s32.totalorder %s17, 0
      %p79 = por %p77, %p78
      %p80 = scmp.ne.s32.totalorder %s72, %s74
      %p81 = scmp.eq.s32.totalorder %s22, 1
      %p82 = por %p80, %p81
      %p83 = scmp.ne.s32.totalorder %s74, %s75
      %p84 = scmp.eq.s32.totalorder %s22, 0
      %p85 = por %p83, %p84
      %p86 = scmp.ne.s32.totalorder %s74, %s75
      %p87 = scmp.eq.s32.totalorder %s23, 1
      %p88 = por %p86, %p87
      %p90 = scmp.ne.s32.totalorder %s75, %s89
      %p91 = scmp.eq.s32.totalorder %s23, 0
      %p92 = por %p90, %p91
      %s94 = sadd.s32 %s93, 1
      %p97 = scmp.eq.s32.totalorder %s17, 1
      %p98 = scmp.ne.s32.totalorder %s93, %s95
      %p99 = scmp.eq.s32.totalorder %s17, 0
      %p100 = por %p98, %p99
      %p101 = scmp.ne.s32.totalorder %s93, %s95
      %p102 = scmp.eq.s32.totalorder %s22, 1
      %p103 = por %p101, %p102
      %p104 = scmp.ne.s32.totalorder %s95, %s96
      %p105 = scmp.eq.s32.totalorder %s22, 0
      %p106 = por %p104, %p105
      %p107 = scmp.ne.s32.totalorder %s95, %s96
      %p108 = scmp.eq.s32.totalorder %s23, 1
      %p109 = por %p107, %p108
      %p111 = scmp.ne.s32.totalorder %s96, %s110
      %p112 = scmp.eq.s32.totalorder %s23, 0
      %p113 = por %p111, %p112
      %s115 = sadd.s32 %s114, 1
      %p118 = scmp.eq.s32.totalorder %s17, 1
      %p119 = scmp.ne.s32.totalorder %s114, %s116
      %p120 = scmp.eq.s32.totalorder %s17, 0
      %p121 = por %p119, %p120
      %p122 = scmp.ne.s32.totalorder %s114, %s116
      %p123 = scmp.eq.s32.totalorder %s22, 1
      %p124 = por %p122, %p123
      %p125 = scmp.ne.s32.totalorder %s116, %s117
      %p126 = scmp.eq.s32.totalorder %s22, 0
      %p127 = por %p125, %p126
      %p128 = scmp.ne.s32.totalorder %s116, %s117
      %p129 = scmp.eq.s32.totalorder %s23, 1
      %p130 = por %p128, %p129
      %p132 = scmp.ne.s32.totalorder %s117, %s131
      %p133 = scmp.eq.s32.totalorder %s23, 0
      %p134 = por %p132, %p133
      %s136 = sadd.s32 %s135, 1
      %p139 = scmp.eq.s32.totalorder %s17, 1
      %p140 = scmp.ne.s32.totalorder %s135, %s137
      %p141 = scmp.eq.s32.totalorder %s17, 0
      %p142 = por %p140, %p141
      %p143 = scmp.ne.s32.totalorder %s135, %s137
      %p144 = scmp.eq.s32.totalorder %s22, 1
      %p145 = por %p143, %p144
      %p146 = scmp.ne.s32.totalorder %s137, %s138
      %p147 = scmp.eq.s32.totalorder %s22, 0
      %p148 = por %p146, %p147
      %p149 = scmp.ne.s32.totalorder %s137, %s138
      %p150 = scmp.eq.s32.totalorder %s23, 1
      %p151 = por %p149, %p150
      %p153 = scmp.ne.s32.totalorder %s138, %s152
      %p154 = scmp.eq.s32.totalorder %s23, 0
      %p155 = por %p153, %p154
      %s157 = sadd.s32 %s156, 1
      %p160 = scmp.eq.s32.totalorder %s17, 1
      %p161 = scmp.ne.s32.totalorder %s156, %s158
      %p162 = scmp.eq.s32.totalorder %s17, 0
      %p163 = por %p161, %p162
      %p164 = scmp.ne.s32.totalorder %s156, %s158
      %p165 = scmp.eq.s32.totalorder %s22, 1
      %p166 = por %p164, %p165
      %p167 = scmp.ne.s32.totalorder %s158, %s159
      %p168 = scmp.eq.s32.totalorder %s22, 0
      %p169 = por %p167, %p168
      %p170 = scmp.ne.s32.totalorder %s158, %s159
      %p171 = scmp.eq.s32.totalorder %s23, 1
      %p172 = por %p170, %p171
      %p174 = scmp.ne.s32.totalorder %s159, %s173
      %p175 = scmp.eq.s32.totalorder %s23, 0
      %p176 = por %p174, %p175
      %s177 = ssub.s32 %s17, %s24
      %p178 = scmp.eq.s32.totalorder %s177, 0
      %s180 = sadd.s32 %s179, 1
      %s181 = scalar_select %p178, %s179, %s180
      %p184 = pneg %p178
      %p185 = scmp.eq.s32.totalorder %s17, 1
      %p186 = por %p184, %p185
      %p187 = scmp.ne.s32.totalorder %s179, %s182
      %p188 = scmp.eq.s32.totalorder %s17, 0
      %p189 = por %p187, %p188
      %p190 = scmp.ne.s32.totalorder %s179, %s182
      %p191 = scmp.eq.s32.totalorder %s22, 1
      %p192 = por %p190, %p191
      %p193 = scmp.ne.s32.totalorder %s182, %s183
      %p194 = scmp.eq.s32.totalorder %s22, 0
      %p195 = por %p193, %p194
      %p196 = scmp.ne.s32.totalorder %s182, %s183
      %p197 = scmp.eq.s32.totalorder %s23, 1
      %p198 = por %p196, %p197
      %p200 = scmp.ne.s32.totalorder %s183, %s199
      %p201 = scmp.eq.s32.totalorder %s23, 0
      %p202 = por %p200, %p201
      %p203 = scmp.le.s32.totalorder 1, %s17
      %p204 = scmp.lt.s32.totalorder %s17, 3
      %p205 = pnand %p203, %p204
      %p206 = pneg %p205
      // Predicated region
      $region9: #{tpu_custom_call.1} parent=5 // pred_check
        _
      $region10: #{tpu_custom_call.1} parent=5 // pred_check_branch
        %208 = sbr.rel (%p205) target = $region12
      $region11: #{tpu_custom_call.1} parent=5 // pred_region
        %s209 = ssub.s32 %s17, 1
        // Predicated region
        $region13: #{tpu_custom_call.1} parent=11 // pred_check
          %p210 = pneg %p64
        $region14: #{tpu_custom_call.1} parent=11 // pred_check_branch
          %212 = sbr.rel (%p210) target = $region16
        $region15: #{tpu_custom_call.1} parent=11 // pred_region
          _
        $region16: #{tpu_custom_call.1} parent=11 // pred_fallthru
          _
        // Predicated region
        $region17: #{tpu_custom_call.1} parent=11 // pred_check
          %p213 = pneg %p85
        $region18: #{tpu_custom_call.1} parent=11 // pred_check_branch
          %215 = sbr.rel (%p213) target = $region20
        $region19: #{tpu_custom_call.1} parent=11 // pred_region
          _
        $region20: #{tpu_custom_call.1} parent=11 // pred_fallthru
          _
        // Predicated region
        $region21: #{tpu_custom_call.1} parent=11 // pred_check
          %p216 = pneg %p106
        $region22: #{tpu_custom_call.1} parent=11 // pred_check_branch
          %218 = sbr.rel (%p216) target = $region24
        $region23: #{tpu_custom_call.1} parent=11 // pred_region
          %s220 = ssub.s32 1024, 1024
          %221 = vsyncadd [#allocation3], %s220
          %s222 = sshll.u32 [#allocation2], 4
          %s223 = int_to_ptr.vmem [resolvable:$true] %s222
          %228 = dma.hbm_to_vmem [thread:$0]  %s3, 1024, %s223, [#allocation3], 64, 64, 4
        $region24: #{tpu_custom_call.1} parent=11 // pred_fallthru
          _
        // Predicated region
        $region25: #{tpu_custom_call.1} parent=11 // pred_check
          %p229 = pneg %p127
        $region26: #{tpu_custom_call.1} parent=11 // pred_check_branch
          %231 = sbr.rel (%p229) target = $region28
        $region27: #{tpu_custom_call.1} parent=11 // pred_region
          _
        $region28: #{tpu_custom_call.1} parent=11 // pred_fallthru
          _
        // Predicated region
        $region29: #{tpu_custom_call.1} parent=11 // pred_check
          %p232 = pneg %p148
        $region30: #{tpu_custom_call.1} parent=11 // pred_check_branch
          %234 = sbr.rel (%p232) target = $region32
        $region31: #{tpu_custom_call.1} parent=11 // pred_region
          _
        $region32: #{tpu_custom_call.1} parent=11 // pred_fallthru
          _
        // Predicated region
        $region33: #{tpu_custom_call.1} parent=11 // pred_check
          %p235 = pneg %p169
        $region34: #{tpu_custom_call.1} parent=11 // pred_check_branch
          %237 = sbr.rel (%p235) target = $region36
        $region35: #{tpu_custom_call.1} parent=11 // pred_region
          _
        $region36: #{tpu_custom_call.1} parent=11 // pred_fallthru
          _
      $region12: #{tpu_custom_call.1} parent=5 // pred_fallthru
        _
      %p238 = scmp.lt.s32.totalorder %s17, 2
      // Predicated region
      $region37: #{tpu_custom_call.1} parent=5 // pred_check
        %p239 = pneg %p238
      $region38: #{tpu_custom_call.1} parent=5 // pred_check_branch
        %241 = sbr.rel (%p239) target = $region40
      $region39: #{tpu_custom_call.1} parent=5 // pred_region
        // Predicated region
        $region41: #{tpu_custom_call.1} parent=39 // pred_check
          %p242 = pneg %p37
        $region42: #{tpu_custom_call.1} parent=39 // pred_check_branch
          %244 = sbr.rel (%p242) target = $region44
        $region43: #{tpu_custom_call.1} parent=39 // pred_region
          %s245 = smul.u32 16, %s17
          %p246 = scmp.lt.s32.totalorder %s245, 31
          %s247 = scalar_select %p246, %s245, 31
          %s248 = smul.addr %s247, 4
          %s249 = scalar_lea.vmem %s0, %s248
          %s250 = smul.u32 16, %s17
        $region44: #{tpu_custom_call.1} parent=39 // pred_fallthru
          _
      $region40: #{tpu_custom_call.1} parent=5 // pred_fallthru
        _
      %p251 = scmp.le.s32.totalorder 1, %s17
      %p252 = scmp.lt.s32.totalorder %s17, 3
      %p253 = pnand %p251, %p252
      %p254 = pneg %p253
      // Predicated region
      $region45: #{tpu_custom_call.1} parent=5 // pred_check
        _
      $region46: #{tpu_custom_call.1} parent=5 // pred_check_branch
        %256 = sbr.rel (%p253) target = $region48
      $region47: #{tpu_custom_call.1} parent=5 // pred_region
        %s257 = ssub.s32 %s17, 1
        // Predicated region
        $region49: #{tpu_custom_call.1} parent=47 // pred_check
          %p258 = pneg %p106
        $region50: #{tpu_custom_call.1} parent=47 // pred_check_branch
          %260 = sbr.rel (%p258) target = $region52
        $region51: #{tpu_custom_call.1} parent=47 // pred_region
          %261 = dma.done [#allocation3], 1024
        $region52: #{tpu_custom_call.1} parent=47 // pred_fallthru
          _
        %s262 = smul.u32 16, %s22
        %p263 = scmp.lt.s32.totalorder %s262, 31
        %s264 = scalar_select %p263, %s262, 31
        %s265 = smul.addr %s264, 4
        %s266 = scalar_lea.vmem %s0, %s265
        %p267 = pneg %p43
        %p268 = pneg %p40
        %p269 = pneg %p64
        %p270 = pneg %p61
        %p271 = pneg %p85
        %p272 = pneg %p82
        %p273 = pneg %p106
        %p274 = pneg %p103
        %p275 = pneg %p127
        %p276 = pneg %p124
        %p277 = pneg %p148
        %p278 = pneg %p145
        %p279 = pneg %p169
        %p280 = pneg %p166
        %p281 = pneg %p195
        %p282 = pneg %p192
        %s283 = sand.u32 %s182, 1
        %s284 = scalar_lea.sflag [#allocation4], %s283
        %s285 = sand.u32 %s182, 1
        %s286 = smul.addr %s285, 256
        %s287 = scalar_lea.vmem [#allocation5], %s286
        %s288 = smul.u32 16, %s22
        %p289 = scmp.lt.s32.totalorder %s288, 31
        %s290 = scalar_select %p289, %s288, 31
        %s291 = smul.addr %s290, 4
        %s292 = scalar_lea.vmem %s0, %s291
        %s293 = smul.u32 16, %s22
        %s294 = smul.u32 16, %s22
        %v296 = vld [vmem:[%s292] sm:$0xf]
        %v297 = vld [vmem:[%s292 + $0x4] sm:$0xf]
        %v298 = vld [vmem:[%s292 + $0x8] sm:$0xf]
        %v299 = vld [vmem:[%s292 + $0xc] sm:$0xf]
        %v300 = vld [vmem:[%s292 + $0x10] sm:$0xf]
        %v301 = vld [vmem:[%s292 + $0x14] sm:$0xf]
        %v302 = vld [vmem:[%s292 + $0x18] sm:$0xf]
        %v303 = vld [vmem:[%s292 + $0x1c] sm:$0xf]
        %v304 = vld [vmem:[%s292 + $0x20] sm:$0xf]
        %v305 = vld [vmem:[%s292 + $0x24] sm:$0xf]
        %v306 = vld [vmem:[%s292 + $0x28] sm:$0xf]
        %v307 = vld [vmem:[%s292 + $0x2c] sm:$0xf]
        %v308 = vld [vmem:[%s292 + $0x30] sm:$0xf]
        %v309 = vld [vmem:[%s292 + $0x34] sm:$0xf]
        %v310 = vld [vmem:[%s292 + $0x38] sm:$0xf]
        %v311 = vld [vmem:[%s292 + $0x3c] sm:$0xf]
        %v312 = vld [vmem:[%s1] sm:$0xf]
        %v313 = vld [vmem:[%s1 + $0x4] sm:$0xf]
        %v314 = vld [vmem:[%s1 + $0x8] sm:$0xf]
        %v315 = vld [vmem:[%s1 + $0xc] sm:$0xf]
        %v316 = vld [vmem:[%s2] sm:$0x1]
        %v318 = vlaneseq
        %v319 = vshrl.u32 %v318, 7
        %v320 = vsub.s32 0, %v319
        %v321 = vrot.slane %v316, %v320
        %v339 = vunpack.c.l.b16 %v296
        %v340 = vunpack.c.l.b16 %v297
        %v341 = vunpack.c.l.b16 %v298
        %v342 = vunpack.c.l.b16 %v299
        %v343 = vunpack.c.l.b16 %v300
        %v344 = vunpack.c.l.b16 %v301
        %v345 = vunpack.c.l.b16 %v302
        %v346 = vunpack.c.l.b16 %v303
        %v347 = vunpack.c.l.b16 %v304
        %v348 = vunpack.c.l.b16 %v305
        %v349 = vunpack.c.l.b16 %v306
        %v350 = vunpack.c.l.b16 %v307
        %v351 = vunpack.c.l.b16 %v308
        %v352 = vunpack.c.l.b16 %v309
        %v353 = vunpack.c.l.b16 %v310
        %v354 = vunpack.c.l.b16 %v311
        %v355 = vpack.c.b16 %v340, %v339
        %v356 = vpack.c.b16 %v342, %v341
        %v357 = vpack.c.b16 %v344, %v343
        %v358 = vpack.c.b16 %v346, %v345
        %v359 = vpack.c.b16 %v348, %v347
        %v360 = vpack.c.b16 %v350, %v349
        %v361 = vpack.c.b16 %v352, %v351
        %v362 = vpack.c.b16 %v354, %v353
        %v367 = vunpack.c.l.b16 %v312
        %v368 = vunpack.c.l.b16 %v313
        %v369 = vunpack.c.l.b16 %v314
        %v370 = vunpack.c.l.b16 %v315
        %v371 = vpack.c.b16 %v368, %v367
        %v372 = vpack.c.b16 %v370, %v369
        %vm375 = vcmask 261120
        %v377 = vsel %vm375, %v355, 0
        %v380 = vsel %vm375, %v356, 0
        %v383 = vsel %vm375, %v357, 0
        %v386 = vsel %vm375, %v358, 0
        %v389 = vsel %vm375, %v359, 0
        %v392 = vsel %vm375, %v360, 0
        %v395 = vsel %vm375, %v361, 0
        %v398 = vsel %vm375, %v362, 0
        %400 = vmatprep.subr.bf16.mxu0 0
        %401 = vmatpush1.bf16.msra.mxu0 %v371
        %402 = vmatprep.subr.bf16.mxu0 0
        %403 = vmatpush1.bf16.msra.mxu0 %v372
        %404 = vmatprep.subr.bf16.mxu0 0
        %405 = vmatpush1.bf16.msra.mxu0 0
        %406 = vmatprep.subr.bf16.mxu0 0
        %407 = vmatpush1.bf16.msra.mxu0 0
        %408 = vmatprep.subr.bf16.mxu0 0
        %409 = vmatpush1.bf16.msra.mxu0 0
        %410 = vmatprep.subr.bf16.mxu0 0
        %411 = vmatpush1.bf16.msra.mxu0 0
        %412 = vmatprep.subr.bf16.mxu0 0
        %413 = vmatpush1.bf16.msra.mxu0 0
        %414 = vmatprep.subr.bf16.mxu0 0
        %415 = vmatpush1.bf16.msra.mxu0 0
        %416 = vmatprep.subr.bf16.mxu0 0
        %417 = vmatpush1.bf16.msra.mxu0 0
        %418 = vmatprep.subr.bf16.mxu0 0
        %419 = vmatpush1.bf16.msra.mxu0 0
        %420 = vmatprep.subr.bf16.mxu0 0
        %421 = vmatpush1.bf16.msra.mxu0 0
        %422 = vmatprep.subr.bf16.mxu0 0
        %423 = vmatpush1.bf16.msra.mxu0 0
        %424 = vmatprep.subr.bf16.mxu0 0
        %425 = vmatpush1.bf16.msra.mxu0 0
        %426 = vmatprep.subr.bf16.mxu0 0
        %427 = vmatpush1.bf16.msra.mxu0 0
        %428 = vmatprep.subr.bf16.mxu0 0
        %429 = vmatpush1.bf16.msra.mxu0 0
        %430 = vmatprep.subr.bf16.mxu0 0
        %431 = vmatpush1.bf16.msra.mxu0 0
        %432 = vmatprep.mubr.bf16.mxu0 0
        %433 = vmatmul.mubr.bf16.gmra.mrb[0].mxu0 %v377
        %v434 = vpop.f32.mrb[0].mxu0
        %v435 = vadd.f32 %v321, %v434
        %v436 = vpop.f32.mrb[0].mxu0
        %v437 = vpop.f32.mrb[0].mxu0
        %v438 = vadd.f32 %v321, %v437
        %v439 = vpop.f32.mrb[0].mxu0
        %440 = vmatprep.mubr.bf16.mxu0 0
        %441 = vmatmul.mubr.bf16.gmra.mrb[0].mxu0 %v380
        %v442 = vpop.f32.mrb[0].mxu0
        %v443 = vadd.f32 %v321, %v442
        %v444 = vpop.f32.mrb[0].mxu0
        %v445 = vpop.f32.mrb[0].mxu0
        %v446 = vadd.f32 %v321, %v445
        %v447 = vpop.f32.mrb[0].mxu0
        %448 = vmatprep.mubr.bf16.mxu0 0
        %449 = vmatmul.mubr.bf16.gmra.mrb[0].mxu0 %v383
        %v450 = vpop.f32.mrb[0].mxu0
        %v451 = vadd.f32 %v321, %v450
        %v452 = vpop.f32.mrb[0].mxu0
        %v453 = vpop.f32.mrb[0].mxu0
        %v454 = vadd.f32 %v321, %v453
        %v455 = vpop.f32.mrb[0].mxu0
        %456 = vmatprep.mubr.bf16.mxu0 0
        %457 = vmatmul.mubr.bf16.gmra.mrb[0].mxu0 %v386
        %v458 = vpop.f32.mrb[0].mxu0
        %v459 = vadd.f32 %v321, %v458
        %v460 = vpop.f32.mrb[0].mxu0
        %v461 = vpop.f32.mrb[0].mxu0
        %v462 = vadd.f32 %v321, %v461
        %v463 = vpop.f32.mrb[0].mxu0
        %464 = vmatprep.mubr.bf16.mxu0 0
        %465 = vmatmul.mubr.bf16.gmra.mrb[0].mxu0 %v389
        %v466 = vpop.f32.mrb[0].mxu0
        %v467 = vadd.f32 %v321, %v466
        %v468 = vpop.f32.mrb[0].mxu0
        %v469 = vpop.f32.mrb[0].mxu0
        %v470 = vadd.f32 %v321, %v469
        %v471 = vpop.f32.mrb[0].mxu0
        %472 = vmatprep.mubr.bf16.mxu0 0
        %473 = vmatmul.mubr.bf16.gmra.mrb[0].mxu0 %v392
        %v474 = vpop.f32.mrb[0].mxu0
        %v475 = vadd.f32 %v321, %v474
        %v476 = vpop.f32.mrb[0].mxu0
        %v477 = vpop.f32.mrb[0].mxu0
        %v478 = vadd.f32 %v321, %v477
        %v479 = vpop.f32.mrb[0].mxu0
        %480 = vmatprep.mubr.bf16.mxu0 0
        %481 = vmatmul.mubr.bf16.gmra.mrb[0].mxu0 %v395
        %v482 = vpop.f32.mrb[0].mxu0
        %v483 = vadd.f32 %v321, %v482
        %v484 = vpop.f32.mrb[0].mxu0
        %v485 = vpop.f32.mrb[0].mxu0
        %v486 = vadd.f32 %v321, %v485
        %v487 = vpop.f32.mrb[0].mxu0
        %488 = vmatprep.mubr.bf16.mxu0 0
        %489 = vmatmul.mubr.bf16.gmra.mrb[0].mxu0 %v398
        %v490 = vpop.f32.mrb[0].mxu0
        %v491 = vadd.f32 %v321, %v490
        %v492 = vpop.f32.mrb[0].mxu0
        %v493 = vpop.f32.mrb[0].mxu0
        %v494 = vadd.f32 %v321, %v493
        %v495 = vpop.f32.mrb[0].mxu0
        %496 = vdwg.mxu0
        %v497 = vmax.f32 %v435, 0.0
        %v498 = vmax.f32 %v438, 0.0
        %v499 = vmax.f32 %v443, 0.0
        %v500 = vmax.f32 %v446, 0.0
        %v501 = vmax.f32 %v451, 0.0
        %v502 = vmax.f32 %v454, 0.0
        %v503 = vmax.f32 %v459, 0.0
        %v504 = vmax.f32 %v462, 0.0
        %v505 = vmax.f32 %v467, 0.0
        %v506 = vmax.f32 %v470, 0.0
        %v507 = vmax.f32 %v475, 0.0
        %v508 = vmax.f32 %v478, 0.0
        %v509 = vmax.f32 %v483, 0.0
        %v510 = vmax.f32 %v486, 0.0
        %v511 = vmax.f32 %v491, 0.0
        %v512 = vmax.f32 %v494, 0.0
        %v513 = vpack.c.bf16 %v498, %v497
        %v514 = vpack.c.bf16 %v500, %v499
        %v515 = vpack.c.bf16 %v502, %v501
        %v516 = vpack.c.bf16 %v504, %v503
        %v517 = vpack.c.bf16 %v506, %v505
        %v518 = vpack.c.bf16 %v508, %v507
        %v519 = vpack.c.bf16 %v510, %v509
        %v520 = vpack.c.bf16 %v512, %v511
        %v521 = vld [vmem:[#allocation2] sm:$0xf]
        %v522 = vld [vmem:[#allocation2 + $0x4] sm:$0xf]
        %v523 = vld [vmem:[#allocation2 + $0x8] sm:$0xf]
        %v524 = vld [vmem:[#allocation2 + $0xc] sm:$0xf]
        %v525 = vld [vmem:[#allocation2 + $0x10] sm:$0xf]
        %v526 = vld [vmem:[#allocation2 + $0x14] sm:$0xf]
        %v527 = vld [vmem:[#allocation2 + $0x18] sm:$0xf]
        %v528 = vld [vmem:[#allocation2 + $0x1c] sm:$0xf]
        %v529 = vld [vmem:[#allocation2 + $0x20] sm:$0xf]
        %v530 = vld [vmem:[#allocation2 + $0x24] sm:$0xf]
        %v531 = vld [vmem:[#allocation2 + $0x28] sm:$0xf]
        %v532 = vld [vmem:[#allocation2 + $0x2c] sm:$0xf]
        %v533 = vld [vmem:[#allocation2 + $0x30] sm:$0xf]
        %v534 = vld [vmem:[#allocation2 + $0x34] sm:$0xf]
        %v535 = vld [vmem:[#allocation2 + $0x38] sm:$0xf]
        %v536 = vld [vmem:[#allocation2 + $0x3c] sm:$0xf]
        %v537 = vld [vmem:[%s4] sm:$0x1]
        %v539 = vlaneseq
        %v540 = vshrl.u32 %v539, 7
        %v541 = vsub.s32 0, %v540
        %v542 = vrot.slane %v537, %v541
        %v560 = vunpack.c.l.b16 %v521
        %v561 = vunpack.c.l.b16 %v522
        %v562 = vunpack.c.l.b16 %v523
        %v563 = vunpack.c.l.b16 %v524
        %v564 = vunpack.c.l.b16 %v525
        %v565 = vunpack.c.l.b16 %v526
        %v566 = vunpack.c.l.b16 %v527
        %v567 = vunpack.c.l.b16 %v528
        %v568 = vunpack.c.l.b16 %v529
        %v569 = vunpack.c.l.b16 %v530
        %v570 = vunpack.c.l.b16 %v531
        %v571 = vunpack.c.l.b16 %v532
        %v572 = vunpack.c.l.b16 %v533
        %v573 = vunpack.c.l.b16 %v534
        %v574 = vunpack.c.l.b16 %v535
        %v575 = vunpack.c.l.b16 %v536
        %v576 = vpack.c.b16 %v561, %v560
        %v577 = vpack.c.b16 %v563, %v562
        %v578 = vpack.c.b16 %v565, %v564
        %v579 = vpack.c.b16 %v567, %v566
        %v580 = vpack.c.b16 %v569, %v568
        %v581 = vpack.c.b16 %v571, %v570
        %v582 = vpack.c.b16 %v573, %v572
        %v583 = vpack.c.b16 %v575, %v574
        %592 = vmatprep.subr.bf16.mxu0 0
        %593 = vmatpush1.bf16.msra.mxu0 %v576
        %594 = vmatprep.subr.bf16.mxu0 0
        %595 = vmatpush1.bf16.msra.mxu0 %v577
        %596 = vmatprep.subr.bf16.mxu0 0
        %597 = vmatpush1.bf16.msra.mxu0 %v578
        %598 = vmatprep.subr.bf16.mxu0 0
        %599 = vmatpush1.bf16.msra.mxu0 %v579
        %600 = vmatprep.subr.bf16.mxu0 0
        %601 = vmatpush1.bf16.msra.mxu0 %v580
        %602 = vmatprep.subr.bf16.mxu0 0
        %603 = vmatpush1.bf16.msra.mxu0 %v581
        %604 = vmatprep.subr.bf16.mxu0 0
        %605 = vmatpush1.bf16.msra.mxu0 %v582
        %606 = vmatprep.subr.bf16.mxu0 0
        %607 = vmatpush1.bf16.msra.mxu0 %v583
        %608 = vmatprep.subr.bf16.mxu0 0
        %609 = vmatpush1.bf16.msra.mxu0 0
        %610 = vmatprep.subr.bf16.mxu0 0
        %611 = vmatpush1.bf16.msra.mxu0 0
        %612 = vmatprep.subr.bf16.mxu0 0
        %613 = vmatpush1.bf16.msra.mxu0 0
        %614 = vmatprep.subr.bf16.mxu0 0
        %615 = vmatpush1.bf16.msra.mxu0 0
        %616 = vmatprep.subr.bf16.mxu0 0
        %617 = vmatpush1.bf16.msra.mxu0 0
        %618 = vmatprep.subr.bf16.mxu0 0
        %619 = vmatpush1.bf16.msra.mxu0 0
        %620 = vmatprep.subr.bf16.mxu0 0
        %621 = vmatpush1.bf16.msra.mxu0 0
        %622 = vmatprep.subr.bf16.mxu0 0
        %623 = vmatpush1.bf16.msra.mxu0 0
        %624 = vmatprep.mubr.bf16.mxu0 0
        %625 = vmatmul.mubr.bf16.gmra.mrb[0].mxu0 %v513
        %v626 = vpop.f32.mrb[0].mxu0
        %v627 = vadd.f32 %v542, %v626
        %v628 = vpop.f32.mrb[0].mxu0
        %v629 = vpop.f32.mrb[0].mxu0
        %v630 = vadd.f32 %v542, %v629
        %v631 = vpop.f32.mrb[0].mxu0
        %632 = vmatprep.mubr.bf16.mxu0 0
        %633 = vmatmul.mubr.bf16.gmra.mrb[0].mxu0 %v514
        %v634 = vpop.f32.mrb[0].mxu0
        %v635 = vadd.f32 %v542, %v634
        %v636 = vpop.f32.mrb[0].mxu0
        %v637 = vpop.f32.mrb[0].mxu0
        %v638 = vadd.f32 %v542, %v637
        %v639 = vpop.f32.mrb[0].mxu0
        %640 = vmatprep.mubr.bf16.mxu0 0
        %641 = vmatmul.mubr.bf16.gmra.mrb[0].mxu0 %v515
        %v642 = vpop.f32.mrb[0].mxu0
        %v643 = vadd.f32 %v542, %v642
        %v644 = vpop.f32.mrb[0].mxu0
        %v645 = vpop.f32.mrb[0].mxu0
        %v646 = vadd.f32 %v542, %v645
        %v647 = vpop.f32.mrb[0].mxu0
        %648 = vmatprep.mubr.bf16.mxu0 0
        %649 = vmatmul.mubr.bf16.gmra.mrb[0].mxu0 %v516
        %v650 = vpop.f32.mrb[0].mxu0
        %v651 = vadd.f32 %v542, %v650
        %v652 = vpop.f32.mrb[0].mxu0
        %v653 = vpop.f32.mrb[0].mxu0
        %v654 = vadd.f32 %v542, %v653
        %v655 = vpop.f32.mrb[0].mxu0
        %656 = vmatprep.mubr.bf16.mxu0 0
        %657 = vmatmul.mubr.bf16.gmra.mrb[0].mxu0 %v517
        %v658 = vpop.f32.mrb[0].mxu0
        %v659 = vadd.f32 %v542, %v658
        %v660 = vpop.f32.mrb[0].mxu0
        %v661 = vpop.f32.mrb[0].mxu0
        %v662 = vadd.f32 %v542, %v661
        %v663 = vpop.f32.mrb[0].mxu0
        %664 = vmatprep.mubr.bf16.mxu0 0
        %665 = vmatmul.mubr.bf16.gmra.mrb[0].mxu0 %v518
        %v666 = vpop.f32.mrb[0].mxu0
        %v667 = vadd.f32 %v542, %v666
        %v668 = vpop.f32.mrb[0].mxu0
        %v669 = vpop.f32.mrb[0].mxu0
        %v670 = vadd.f32 %v542, %v669
        %v671 = vpop.f32.mrb[0].mxu0
        %672 = vmatprep.mubr.bf16.mxu0 0
        %673 = vmatmul.mubr.bf16.gmra.mrb[0].mxu0 %v519
        %v674 = vpop.f32.mrb[0].mxu0
        %v675 = vadd.f32 %v542, %v674
        %v676 = vpop.f32.mrb[0].mxu0
        %v677 = vpop.f32.mrb[0].mxu0
        %v678 = vadd.f32 %v542, %v677
        %v679 = vpop.f32.mrb[0].mxu0
        %680 = vmatprep.mubr.bf16.mxu0 0
        %681 = vmatmul.mubr.bf16.gmra.mrb[0].mxu0 %v520
        %v682 = vpop.f32.mrb[0].mxu0
        %v683 = vadd.f32 %v542, %v682
        %v684 = vpop.f32.mrb[0].mxu0
        %v685 = vpop.f32.mrb[0].mxu0
        %v686 = vadd.f32 %v542, %v685
        %v687 = vpop.f32.mrb[0].mxu0
        %688 = vdwg.mxu0
        %v689 = vmax.f32 %v627, 0.0
        %v690 = vmax.f32 %v630, 0.0
        %v691 = vmax.f32 %v635, 0.0
        %v692 = vmax.f32 %v638, 0.0
        %v693 = vmax.f32 %v643, 0.0
        %v694 = vmax.f32 %v646, 0.0
        %v695 = vmax.f32 %v651, 0.0
        %v696 = vmax.f32 %v654, 0.0
        %v697 = vmax.f32 %v659, 0.0
        %v698 = vmax.f32 %v662, 0.0
        %v699 = vmax.f32 %v667, 0.0
        %v700 = vmax.f32 %v670, 0.0
        %v701 = vmax.f32 %v675, 0.0
        %v702 = vmax.f32 %v678, 0.0
        %v703 = vmax.f32 %v683, 0.0
        %v704 = vmax.f32 %v686, 0.0
        %v705 = vpack.c.bf16 %v690, %v689
        %v706 = vpack.c.bf16 %v692, %v691
        %v707 = vpack.c.bf16 %v694, %v693
        %v708 = vpack.c.bf16 %v696, %v695
        %v709 = vpack.c.bf16 %v698, %v697
        %v710 = vpack.c.bf16 %v700, %v699
        %v711 = vpack.c.bf16 %v702, %v701
        %v712 = vpack.c.bf16 %v704, %v703
        %v713 = vld [vmem:[%s5] sm:$0xff]
        %v714 = vld [vmem:[%s5 + $0x8] sm:$0xff]
        %v715 = vld [vmem:[%s5 + $0x10] sm:$0xff]
        %v716 = vld [vmem:[%s5 + $0x18] sm:$0xff]
        %v717 = vld [vmem:[%s5 + $0x20] sm:$0xff]
        %v718 = vld [vmem:[%s5 + $0x28] sm:$0xff]
        %v719 = vld [vmem:[%s5 + $0x30] sm:$0xff]
        %v720 = vld [vmem:[%s5 + $0x38] sm:$0xff]
        %v721 = vld [vmem:[%s5 + $0x40] sm:$0xff]
        %v722 = vld [vmem:[%s5 + $0x48] sm:$0xff]
        %v723 = vld [vmem:[%s5 + $0x50] sm:$0xff]
        %v724 = vld [vmem:[%s5 + $0x58] sm:$0xff]
        %v725 = vld [vmem:[%s5 + $0x60] sm:$0xff]
        %v726 = vld [vmem:[%s5 + $0x68] sm:$0xff]
        %v727 = vld [vmem:[%s5 + $0x70] sm:$0xff]
        %v728 = vld [vmem:[%s5 + $0x78] sm:$0xff]
        %v729 = vld [vmem:[%s6] sm:$0x3]
        %v731 = vlaneseq
        %v732 = vshrl.u32 %v731, 7
        %v733 = vsub.s32 0, %v732
        %v734 = vrot.slane %v729, %v733
        %v735 = vlaneseq
        %v736 = vshrl.u32 %v735, 7
        %v737 = vsub.s32 1, %v736
        %v738 = vrot.slane %v729, %v737
        %v757 = vunpack.c.l.b16 %v713
        %v758 = vunpack.c.h.b16 %v713
        %v759 = vunpack.c.l.b16 %v714
        %v760 = vunpack.c.h.b16 %v714
        %v761 = vunpack.c.l.b16 %v715
        %v762 = vunpack.c.h.b16 %v715
        %v763 = vunpack.c.l.b16 %v716
        %v764 = vunpack.c.h.b16 %v716
        %v765 = vunpack.c.l.b16 %v717
        %v766 = vunpack.c.h.b16 %v717
        %v767 = vunpack.c.l.b16 %v718
        %v768 = vunpack.c.h.b16 %v718
        %v769 = vunpack.c.l.b16 %v719
        %v770 = vunpack.c.h.b16 %v719
        %v771 = vunpack.c.l.b16 %v720
        %v772 = vunpack.c.h.b16 %v720
        %v773 = vunpack.c.l.b16 %v721
        %v774 = vunpack.c.h.b16 %v721
        %v775 = vunpack.c.l.b16 %v722
        %v776 = vunpack.c.h.b16 %v722
        %v777 = vunpack.c.l.b16 %v723
        %v778 = vunpack.c.h.b16 %v723
        %v779 = vunpack.c.l.b16 %v724
        %v780 = vunpack.c.h.b16 %v724
        %v781 = vunpack.c.l.b16 %v725
        %v782 = vunpack.c.h.b16 %v725
        %v783 = vunpack.c.l.b16 %v726
        %v784 = vunpack.c.h.b16 %v726
        %v785 = vunpack.c.l.b16 %v727
        %v786 = vunpack.c.h.b16 %v727
        %v787 = vunpack.c.l.b16 %v728
        %v788 = vunpack.c.h.b16 %v728
        %v789 = vpack.c.b16 %v759, %v757
        %v790 = vpack.c.b16 %v760, %v758
        %v791 = vpack.c.b16 %v763, %v761
        %v792 = vpack.c.b16 %v764, %v762
        %v793 = vpack.c.b16 %v767, %v765
        %v794 = vpack.c.b16 %v768, %v766
        %v795 = vpack.c.b16 %v771, %v769
        %v796 = vpack.c.b16 %v772, %v770
        %v797 = vpack.c.b16 %v775, %v773
        %v798 = vpack.c.b16 %v776, %v774
        %v799 = vpack.c.b16 %v779, %v777
        %v800 = vpack.c.b16 %v780, %v778
        %v801 = vpack.c.b16 %v783, %v781
        %v802 = vpack.c.b16 %v784, %v782
        %v803 = vpack.c.b16 %v787, %v785
        %v804 = vpack.c.b16 %v788, %v786
        %821 = vmatprep.subr.bf16.mxu0 %v790
        %822 = vmatpush1.bf16.msra.mxu0 %v789
        %823 = vmatprep.subr.bf16.mxu0 %v792
        %824 = vmatpush1.bf16.msra.mxu0 %v791
        %825 = vmatprep.subr.bf16.mxu0 %v794
        %826 = vmatpush1.bf16.msra.mxu0 %v793
        %827 = vmatprep.subr.bf16.mxu0 %v796
        %828 = vmatpush1.bf16.msra.mxu0 %v795
        %829 = vmatprep.subr.bf16.mxu0 %v798
        %830 = vmatpush1.bf16.msra.mxu0 %v797
        %831 = vmatprep.subr.bf16.mxu0 %v800
        %832 = vmatpush1.bf16.msra.mxu0 %v799
        %833 = vmatprep.subr.bf16.mxu0 %v802
        %834 = vmatpush1.bf16.msra.mxu0 %v801
        %835 = vmatprep.subr.bf16.mxu0 %v804
        %836 = vmatpush1.bf16.msra.mxu0 %v803
        %837 = vmatprep.subr.bf16.mxu0 0
        %838 = vmatpush1.bf16.msra.mxu0 0
        %839 = vmatprep.subr.bf16.mxu0 0
        %840 = vmatpush1.bf16.msra.mxu0 0
        %841 = vmatprep.subr.bf16.mxu0 0
        %842 = vmatpush1.bf16.msra.mxu0 0
        %843 = vmatprep.subr.bf16.mxu0 0
        %844 = vmatpush1.bf16.msra.mxu0 0
        %845 = vmatprep.subr.bf16.mxu0 0
        %846 = vmatpush1.bf16.msra.mxu0 0
        %847 = vmatprep.subr.bf16.mxu0 0
        %848 = vmatpush1.bf16.msra.mxu0 0
        %849 = vmatprep.subr.bf16.mxu0 0
        %850 = vmatpush1.bf16.msra.mxu0 0
        %851 = vmatprep.subr.bf16.mxu0 0
        %852 = vmatpush1.bf16.msra.mxu0 0
        %853 = vmatprep.mubr.bf16.mxu0 0
        %854 = vmatmul.mubr.bf16.gmra.mrb[0].mxu0 %v705
        %v855 = vpop.f32.mrb[0].mxu0
        %v856 = vadd.f32 %v734, %v855
        %v857 = vpop.f32.mrb[0].mxu0
        %v858 = vadd.f32 %v738, %v857
        %v859 = vpop.f32.mrb[0].mxu0
        %v860 = vadd.f32 %v734, %v859
        %v861 = vpop.f32.mrb[0].mxu0
        %v862 = vadd.f32 %v738, %v861
        %863 = vmatprep.mubr.bf16.mxu0 0
        %864 = vmatmul.mubr.bf16.gmra.mrb[0].mxu0 %v706
        %v865 = vpop.f32.mrb[0].mxu0
        %v866 = vadd.f32 %v734, %v865
        %v867 = vpop.f32.mrb[0].mxu0
        %v868 = vadd.f32 %v738, %v867
        %v869 = vpop.f32.mrb[0].mxu0
        %v870 = vadd.f32 %v734, %v869
        %v871 = vpop.f32.mrb[0].mxu0
        %v872 = vadd.f32 %v738, %v871
        %873 = vmatprep.mubr.bf16.mxu0 0
        %874 = vmatmul.mubr.bf16.gmra.mrb[0].mxu0 %v707
        %v875 = vpop.f32.mrb[0].mxu0
        %v876 = vadd.f32 %v734, %v875
        %v877 = vpop.f32.mrb[0].mxu0
        %v878 = vadd.f32 %v738, %v877
        %v879 = vpop.f32.mrb[0].mxu0
        %v880 = vadd.f32 %v734, %v879
        %v881 = vpop.f32.mrb[0].mxu0
        %v882 = vadd.f32 %v738, %v881
        %883 = vmatprep.mubr.bf16.mxu0 0
        %884 = vmatmul.mubr.bf16.gmra.mrb[0].mxu0 %v708
        %v885 = vpop.f32.mrb[0].mxu0
        %v886 = vadd.f32 %v734, %v885
        %v887 = vpop.f32.mrb[0].mxu0
        %v888 = vadd.f32 %v738, %v887
        %v889 = vpop.f32.mrb[0].mxu0
        %v890 = vadd.f32 %v734, %v889
        %v891 = vpop.f32.mrb[0].mxu0
        %v892 = vadd.f32 %v738, %v891
        %893 = vmatprep.mubr.bf16.mxu0 0
        %894 = vmatmul.mubr.bf16.gmra.mrb[0].mxu0 %v709
        %v895 = vpop.f32.mrb[0].mxu0
        %v896 = vadd.f32 %v734, %v895
        %v897 = vpop.f32.mrb[0].mxu0
        %v898 = vadd.f32 %v738, %v897
        %v899 = vpop.f32.mrb[0].mxu0
        %v900 = vadd.f32 %v734, %v899
        %v901 = vpop.f32.mrb[0].mxu0
        %v902 = vadd.f32 %v738, %v901
        %903 = vmatprep.mubr.bf16.mxu0 0
        %904 = vmatmul.mubr.bf16.gmra.mrb[0].mxu0 %v710
        %v905 = vpop.f32.mrb[0].mxu0
        %v906 = vadd.f32 %v734, %v905
        %v907 = vpop.f32.mrb[0].mxu0
        %v908 = vadd.f32 %v738, %v907
        %v909 = vpop.f32.mrb[0].mxu0
        %v910 = vadd.f32 %v734, %v909
        %v911 = vpop.f32.mrb[0].mxu0
        %v912 = vadd.f32 %v738, %v911
        %913 = vmatprep.mubr.bf16.mxu0 0
        %914 = vmatmul.mubr.bf16.gmra.mrb[0].mxu0 %v711
        %v915 = vpop.f32.mrb[0].mxu0
        %v916 = vadd.f32 %v734, %v915
        %v917 = vpop.f32.mrb[0].mxu0
        %v918 = vadd.f32 %v738, %v917
        %v919 = vpop.f32.mrb[0].mxu0
        %v920 = vadd.f32 %v734, %v919
        %v921 = vpop.f32.mrb[0].mxu0
        %v922 = vadd.f32 %v738, %v921
        %923 = vmatprep.mubr.bf16.mxu0 0
        %924 = vmatmul.mubr.bf16.gmra.mrb[0].mxu0 %v712
        %v925 = vpop.f32.mrb[0].mxu0
        %v926 = vadd.f32 %v734, %v925
        %v927 = vpop.f32.mrb[0].mxu0
        %v928 = vadd.f32 %v738, %v927
        %v929 = vpop.f32.mrb[0].mxu0
        %v930 = vadd.f32 %v734, %v929
        %v931 = vpop.f32.mrb[0].mxu0
        %v932 = vadd.f32 %v738, %v931
        %933 = vdwg.mxu0
        %934 = vst [vmem:[%s287] sm:$0xff] %v856
        %935 = vst [vmem:[%s287 + $0x8] sm:$0xff] %v858
        %936 = vst [vmem:[%s287 + $0x10] sm:$0xff] %v860
        %937 = vst [vmem:[%s287 + $0x18] sm:$0xff] %v862
        %938 = vst [vmem:[%s287 + $0x20] sm:$0xff] %v866
        %939 = vst [vmem:[%s287 + $0x28] sm:$0xff] %v868
        %940 = vst [vmem:[%s287 + $0x30] sm:$0xff] %v870
        %941 = vst [vmem:[%s287 + $0x38] sm:$0xff] %v872
        %942 = vst [vmem:[%s287 + $0x40] sm:$0xff] %v876
        %943 = vst [vmem:[%s287 + $0x48] sm:$0xff] %v878
        %944 = vst [vmem:[%s287 + $0x50] sm:$0xff] %v880
        %945 = vst [vmem:[%s287 + $0x58] sm:$0xff] %v882
        %946 = vst [vmem:[%s287 + $0x60] sm:$0xff] %v886
        %947 = vst [vmem:[%s287 + $0x68] sm:$0xff] %v888
        %948 = vst [vmem:[%s287 + $0x70] sm:$0xff] %v890
        %949 = vst [vmem:[%s287 + $0x78] sm:$0xff] %v892
        %950 = vst [vmem:[%s287 + $0x80] sm:$0xff] %v896
        %951 = vst [vmem:[%s287 + $0x88] sm:$0xff] %v898
        %952 = vst [vmem:[%s287 + $0x90] sm:$0xff] %v900
        %953 = vst [vmem:[%s287 + $0x98] sm:$0xff] %v902
        %954 = vst [vmem:[%s287 + $0xa0] sm:$0xff] %v906
        %955 = vst [vmem:[%s287 + $0xa8] sm:$0xff] %v908
        %956 = vst [vmem:[%s287 + $0xb0] sm:$0xff] %v910
        %957 = vst [vmem:[%s287 + $0xb8] sm:$0xff] %v912
        %958 = vst [vmem:[%s287 + $0xc0] sm:$0xff] %v916
        %959 = vst [vmem:[%s287 + $0xc8] sm:$0xff] %v918
        %960 = vst [vmem:[%s287 + $0xd0] sm:$0xff] %v920
        %961 = vst [vmem:[%s287 + $0xd8] sm:$0xff] %v922
        %962 = vst [vmem:[%s287 + $0xe0] sm:$0xff] %v926
        %963 = vst [vmem:[%s287 + $0xe8] sm:$0xff] %v928
        %964 = vst [vmem:[%s287 + $0xf0] sm:$0xff] %v930
        %965 = vst [vmem:[%s287 + $0xf8] sm:$0xff] %v932
        %s966 = sand.u32 %s182, 1
        %s967 = scalar_lea.sflag [#allocation4], %s966
        %s968 = sand.u32 %s182, 1
        %s969 = smul.addr %s968, 256
        %s970 = scalar_lea.vmem [#allocation5], %s969
        // Predicated region
        $region53: #{tpu_custom_call.1} parent=47 // pred_check
          %p971 = pneg %p192
        $region54: #{tpu_custom_call.1} parent=47 // pred_check_branch
          %973 = sbr.rel (%p971) target = $region56
        $region55: #{tpu_custom_call.1} parent=47 // pred_region
          %s974 = smul.u32 16, %s22
          %s976 = ssub.s32 4096, 4096
          %977 = vsyncadd %s967, %s976
          %s978 = smul.addr %s974, 2
          %s979 = smul.addr %s978, 128
          %s980 = scalar_lea.hbm %s7, %s979
          %s981 = sshll.u32 %s970, 4
          %s982 = int_to_ptr.vmem [resolvable:$true] %s981
          %987 = dma.vmem_to_hbm [thread:$0]  %s982, 4096, %s980, %s967, 256, 256, 16
        $region56: #{tpu_custom_call.1} parent=47 // pred_fallthru
          _
      $region48: #{tpu_custom_call.1} parent=5 // pred_fallthru
        _
      %p988 = scmp.le.s32.totalorder 2, %s17
      // Predicated region
      $region57: #{tpu_custom_call.1} parent=5 // pred_check
        %p989 = pneg %p988
      $region58: #{tpu_custom_call.1} parent=5 // pred_check_branch
        %991 = sbr.rel (%p989) target = $region60
      $region59: #{tpu_custom_call.1} parent=5 // pred_region
        %s992 = ssub.s32 %s17, 2
        // Predicated region
        $region61: #{tpu_custom_call.1} parent=59 // pred_check
          %p993 = pneg %p198
        $region62: #{tpu_custom_call.1} parent=59 // pred_check_branch
          %995 = sbr.rel (%p993) target = $region64
        $region63: #{tpu_custom_call.1} parent=59 // pred_region
          %s996 = sand.u32 %s183, 1
          %s997 = scalar_lea.sflag [#allocation4], %s996
          %s998 = sand.u32 %s183, 1
          %s999 = smul.addr %s998, 256
          %s1000 = scalar_lea.vmem [#allocation5], %s999
          %1001 = dma.done %s997, 4096
        $region64: #{tpu_custom_call.1} parent=59 // pred_fallthru
          _
      $region60: #{tpu_custom_call.1} parent=5 // pred_fallthru
        _
    $region6: #{tpu_custom_call.1} parent=1 // loop_footer
      %s21 = sadd.s32 1, %s17
    $region7: #{tpu_custom_call.1} parent=1 // loop_footer_branch
      %16 = sbr.rel target = $region3
    $region8: #{tpu_custom_call.1} parent=1 // loop_exit
      _
    %1002 = vsyncpa [#allocation3], 1
    %s1003 = scalar_lea.sflag [#allocation3], 1
    %1004 = vsyncpa %s1003, 1
    %1005 = vsyncpa [#allocation4], 1
    %s1006 = scalar_lea.sflag [#allocation4], 1
    %1007 = vsyncpa %s1006, 1

</llo_original>
